<compile_context>
chip_gen: v6e
topology: v6e:2x2x1
jax: 0.10.0
libtpu: 0.0.40
codegen_flags: <defaults>
</compile_context>

<pallas_src>
import jax
import jax.numpy as jnp
from jax import lax
from jax.experimental import pallas as pl
from jax.experimental.pallas import tpu as pltpu  # noqa: F401  (TPU backend assumed)


def dueling_net_kernel(x_ref, w1_ref, b1_ref, w23_ref, b23_ref, o_ref):
    x = x_ref[...]                                                        # (B, S)

    # fc1 + relu  (MXU matmul, f32 accumulation)
    h = jnp.dot(x, w1_ref[...], preferred_element_type=jnp.float32) + b1_ref[...]
    h = jnp.maximum(h, 0.0)                                               # (B, 24)

    # Fused value/advantage head: single (24, 2A) matmul, then free in-vreg slices.
    head = jnp.dot(h, w23_ref[...], preferred_element_type=jnp.float32) + b23_ref[...]
    B = head.shape[0]
    A = head.shape[1] // 2
    value = head[:, :A]                                                   # (B, A)
    adv = head[:, A:]                                                     # (B, A)

    # PyTorch: torch.mean(adv, dim=-1) -> (B,), broadcast as a (1, B) row against
    # (B, A) (requires B == A).  Build that row without any MXU op or transpose:
    #   1) lane-reduce each row -> (B, 1) column            (XLU)
    #   2) selector (identity mask) multiply + sublane-reduce
    #      to move the column onto the lane axis -> (1, B)  (VPU mul + XLU reduce)
    row_sum = jnp.sum(adv, axis=-1, keepdims=True)                        # (B, 1)
    rows = lax.broadcasted_iota(jnp.int32, (B, B), 0)
    cols = lax.broadcasted_iota(jnp.int32, (B, B), 1)
    eye = (rows == cols).astype(jnp.float32)                              # (B, B)
    mean_row = jnp.sum(row_sum * eye, axis=0, keepdims=True) * (1.0 / A)  # (1, B)

    o_ref[...] = value + (adv - mean_row)                                 # (B, A)


def dueling_net_forward(x, params):
    w1, b1, w2, b2, w3, b3 = params
    B = x.shape[0]
    A = w2.shape[1]

    # Host-side head fusion: one (24, 2A) weight and one (1, 2A) bias.
    w23 = jnp.concatenate([w2, w3], axis=1)
    b23 = jnp.concatenate([b2, b3], axis=1)

    def full_spec(a):
        nd = a.ndim
        return pl.BlockSpec(a.shape, lambda *_: (0,) * nd)

    return pl.pallas_call(
        dueling_net_kernel,
        out_shape=jax.ShapeDtypeStruct((B, A), jnp.float32),
        in_specs=[full_spec(x), full_spec(w1), full_spec(b1),
                  full_spec(w23), full_spec(b23)],
        out_specs=pl.BlockSpec((B, A), lambda *_: (0, 0)),
    )(x, w1, b1, w23, b23)


if __name__ == "__main__":
    # Small shapes consistent with the module.  B must equal action_space for the
    # keepdim-less mean broadcast (exactly as in the PyTorch original).
    batch = 2
    state_space = 8
    hidden = 24            # fixed by the module (fc1 -> 24)
    action_space = 2

    key = jax.random.PRNGKey(0)
    ks = jax.random.split(key, 7)

    def uinit(k, shape, fan_in):
        bound = 1.0 / float(fan_in) ** 0.5     # PyTorch nn.Linear default init range
        return jax.random.uniform(k, shape, jnp.float32, -bound, bound)

    # Weights stored as (in, out) == transposed nn.Linear weight; biases as (1, out).
    w1 = uinit(ks[0], (state_space, hidden), state_space)
    b1 = uinit(ks[1], (1, hidden), state_space)
    w2 = uinit(ks[2], (hidden, action_space), hidden)
    b2 = uinit(ks[3], (1, action_space), hidden)
    w3 = uinit(ks[4], (hidden, action_space), hidden)
    b3 = uinit(ks[5], (1, action_space), hidden)
    x = jax.random.normal(ks[6], (batch, state_space), jnp.float32)

    out = dueling_net_forward(x, (w1, b1, w2, b2, w3, b3))
    out = jax.block_until_ready(out)

    # Pure-JAX reference with identical (NumPy/PyTorch) broadcasting semantics.
    h_ref = jnp.maximum(x @ w1 + b1[0], 0.0)
    value_ref = h_ref @ w2 + b2[0]
    adv_ref = h_ref @ w3 + b3[0]
    ref = value_ref + (adv_ref - jnp.mean(adv_ref, axis=-1))
    assert out.shape == (batch, action_space)
    assert jnp.allclose(out, ref, atol=1e-5, rtol=1e-5), (out, ref)

    print("KERNEL_OK")
</pallas_src>

<mosaic_0001>
module attributes {stable_mosaic.version = 11 : i64} {
  func.func @dueling_net_kernel(%arg0: memref<2x8xf32, #tpu.memory_space<vmem>>, %arg1: memref<8x24xf32, #tpu.memory_space<vmem>>, %arg2: memref<1x24xf32, #tpu.memory_space<vmem>>, %arg3: memref<24x4xf32, #tpu.memory_space<vmem>>, %arg4: memref<1x4xf32, #tpu.memory_space<vmem>>, %arg5: memref<2x2xf32, #tpu.memory_space<vmem>>) attributes {dimension_semantics = [], scalar_prefetch = 0 : i64, scratch_operands = 0 : i64, tpu.core_type = #tpu.core_type<tc>} {
    %c0 = arith.constant 0 : index
    %c0_0 = arith.constant 0 : index
    %0 = vector.load %arg0[%c0, %c0_0] : memref<2x8xf32, #tpu.memory_space<vmem>>, vector<2x8xf32>
    %c0_1 = arith.constant 0 : index
    %c0_2 = arith.constant 0 : index
    %1 = vector.load %arg1[%c0_1, %c0_2] : memref<8x24xf32, #tpu.memory_space<vmem>>, vector<8x24xf32>
    %cst = arith.constant dense<0.000000e+00> : vector<2x24xf32>
    %2 = tpu.matmul %0, %1, %cst {dimension_numbers = #tpu.dot_dimension_numbers<[1], [0], [0], [1], [0, 0, 1, 1], [], []>} : vector<2x8xf32>, vector<8x24xf32>, vector<2x24xf32> -> vector<2x24xf32>
    %c0_3 = arith.constant 0 : index
    %c0_4 = arith.constant 0 : index
    %3 = vector.load %arg2[%c0_3, %c0_4] : memref<1x24xf32, #tpu.memory_space<vmem>>, vector<1x24xf32>
    %4 = vector.broadcast %3 : vector<1x24xf32> to vector<2x24xf32>
    %5 = arith.addf %2, %4 : vector<2x24xf32>
    %cst_5 = arith.constant 0.000000e+00 : f32
    %6 = vector.broadcast %cst_5 : f32 to vector<2x24xf32>
    %7 = arith.maximumf %5, %6 : vector<2x24xf32>
    %c0_6 = arith.constant 0 : index
    %c0_7 = arith.constant 0 : index
    %8 = vector.load %arg3[%c0_6, %c0_7] : memref<24x4xf32, #tpu.memory_space<vmem>>, vector<24x4xf32>
    %cst_8 = arith.constant dense<0.000000e+00> : vector<2x4xf32>
    %9 = tpu.matmul %7, %8, %cst_8 {dimension_numbers = #tpu.dot_dimension_numbers<[1], [0], [0], [1], [0, 0, 1, 1], [], []>} : vector<2x24xf32>, vector<24x4xf32>, vector<2x4xf32> -> vector<2x4xf32>
    %c0_9 = arith.constant 0 : index
    %c0_10 = arith.constant 0 : index
    %10 = vector.load %arg4[%c0_9, %c0_10] : memref<1x4xf32, #tpu.memory_space<vmem>>, vector<1x4xf32>
    %11 = vector.broadcast %10 : vector<1x4xf32> to vector<2x4xf32>
    %12 = arith.addf %9, %11 : vector<2x4xf32>
    %13 = vector.extract_strided_slice %12 {offsets = [0, 0], sizes = [2, 2], strides = [1, 1]} : vector<2x4xf32> to vector<2x2xf32>
    %14 = vector.extract_strided_slice %12 {offsets = [0, 2], sizes = [2, 2], strides = [1, 1]} : vector<2x4xf32> to vector<2x2xf32>
    %cst_11 = arith.constant dense<0.000000e+00> : vector<2xf32>
    %15 = vector.multi_reduction <add>, %14, %cst_11 [1] : vector<2x2xf32> to vector<2xf32>
    %16 = vector.shape_cast %15 : vector<2xf32> to vector<2x1xf32>
    %17 = tpu.iota {dimensions = array<i32: 0>} : vector<2x2xi32>
    %18 = tpu.iota {dimensions = array<i32: 1>} : vector<2x2xi32>
    %19 = arith.cmpi eq, %17, %18 : vector<2x2xi32>
    %20 = arith.extui %19 : vector<2x2xi1> to vector<2x2xi32>
    %21 = arith.sitofp %20 : vector<2x2xi32> to vector<2x2xf32>
    %22 = vector.broadcast %16 : vector<2x1xf32> to vector<2x2xf32>
    %23 = arith.mulf %22, %21 : vector<2x2xf32>
    %cst_12 = arith.constant dense<0.000000e+00> : vector<2xf32>
    %24 = vector.multi_reduction <add>, %23, %cst_12 [0] : vector<2x2xf32> to vector<2xf32>
    %25 = vector.shape_cast %24 : vector<2xf32> to vector<1x2xf32>
    %cst_13 = arith.constant 5.000000e-01 : f32
    %26 = vector.broadcast %cst_13 : f32 to vector<1x2xf32>
    %27 = arith.mulf %25, %26 : vector<1x2xf32>
    %28 = vector.broadcast %27 : vector<1x2xf32> to vector<2x2xf32>
    %29 = arith.subf %14, %28 : vector<2x2xf32>
    %30 = arith.addf %13, %29 : vector<2x2xf32>
    %c0_14 = arith.constant 0 : index
    %c0_15 = arith.constant 0 : index
    %31 = vector.load %arg5[%c0_14, %c0_15] : memref<2x2xf32, #tpu.memory_space<vmem>>, vector<2x2xf32>
    tpu.vector_store %arg5[%c0_14, %c0_15], %30 {strides = array<i32>} : memref<2x2xf32, #tpu.memory_space<vmem>>, vector<2x2xf32>,
    return
  }
}

</mosaic_0001>

<llo_original>
// kernel: tpu_custom_call.1
$region0: #{tpu_custom_call.1}
  #allocation0 [shape = 'u32[]', space=smem, size = 0x4, offset = 0x4, fixed_abs, tag = 'smem constant byte address 0x4 - core index']
  #allocation1 [shape = 'u32[144,128]{1,0:T(1,128)}', space=vmem, size = 0x12000, scoped, tag = 'internal scratch']
  %s0 = inlined_call_operand.vmem [shape: f32[2,8], index: 0, kind: input, shape index: {}]
  %s1 = inlined_call_operand.vmem [shape: f32[8,24], index: 1, kind: input, shape index: {}]
  %s2 = inlined_call_operand.vmem [shape: f32[1,24], index: 2, kind: input, shape index: {}]
  %s3 = inlined_call_operand.vmem [shape: f32[24,4], index: 3, kind: input, shape index: {}]
  %s4 = inlined_call_operand.vmem [shape: f32[1,4], index: 4, kind: input, shape index: {}]
  %s5 = inlined_call_operand.hbm [shape: f32[2,2], index: 5, kind: output, shape index: {}]
  %s6 = sld [smem:[#allocation0]]
  $region30: #{tpu_custom_call.1} parent=0
    _
  %s8 = ssub.s32 1, %s6
  %s9 = scalar_select 0, %s8, %s6
  $region1: #{tpu_custom_call.1} parent=0
    #allocation2 [shape = 'u8[1024]{0}', space=vmem, size = 0x400, scoped, tag = 'output window, operand 0, single buffered']
    #allocation3 [shape = 's32[1]{0}', space=sflag, size = 0x4, scoped, tag = 'scoped memory for tpu_custom_call.1']
    %10 = vsyncpa [#allocation3], 0
    // Predicated region
    $region2: #{tpu_custom_call.1} parent=1 // pred_check
      _
    $region3: #{tpu_custom_call.1} parent=1 // pred_check_branch
      %12 = sbr.rel (0) target = $region5
    $region4: #{tpu_custom_call.1} parent=1 // pred_region
      _
    $region5: #{tpu_custom_call.1} parent=1 // pred_fallthru
      _
    // Predicated region
    $region6: #{tpu_custom_call.1} parent=1 // pred_check
      _
    $region7: #{tpu_custom_call.1} parent=1 // pred_check_branch
      %14 = sbr.rel (0) target = $region9
    $region8: #{tpu_custom_call.1} parent=1 // pred_region
      _
    $region9: #{tpu_custom_call.1} parent=1 // pred_fallthru
      _
    // Predicated region
    $region10: #{tpu_custom_call.1} parent=1 // pred_check
      _
    $region11: #{tpu_custom_call.1} parent=1 // pred_check_branch
      %16 = sbr.rel (0) target = $region13
    $region12: #{tpu_custom_call.1} parent=1 // pred_region
      _
    $region13: #{tpu_custom_call.1} parent=1 // pred_fallthru
      _
    // Predicated region
    $region14: #{tpu_custom_call.1} parent=1 // pred_check
      _
    $region15: #{tpu_custom_call.1} parent=1 // pred_check_branch
      %18 = sbr.rel (0) target = $region17
    $region16: #{tpu_custom_call.1} parent=1 // pred_region
      _
    $region17: #{tpu_custom_call.1} parent=1 // pred_fallthru
      _
    // Predicated region
    $region18: #{tpu_custom_call.1} parent=1 // pred_check
      _
    $region19: #{tpu_custom_call.1} parent=1 // pred_check_branch
      %20 = sbr.rel (0) target = $region21
    $region20: #{tpu_custom_call.1} parent=1 // pred_region
      _
    $region21: #{tpu_custom_call.1} parent=1 // pred_fallthru
      _
    %v21 = vld [vmem:[%s0] sm:$0x3]
    %v22 = vld [vmem:[%s1] sm:$0xff]
    %v23 = vld [vmem:[%s2] sm:$0x1]
    %v25 = vlaneseq
    %v26 = vshrl.u32 %v25, 7
    %v27 = vsub.s32 0, %v26
    %v28 = vrot.slane %v23, %v27
    %vm30 = vcmask 64512
    %v32 = vsel %vm30, %v21, 0
    %34 = vmatprep.subr.mxu0 0.0
    %35 = vmatpush1.msra.mxu0 0.0
    %36 = vmatprep.subr.mxu0 0.0
    %37 = vmatpush1.msra.mxu0 0.0
    %38 = vmatprep.subr.mxu0 0.0
    %39 = vmatpush1.msra.mxu0 0.0
    %40 = vmatprep.subr.mxu0 0.0
    %41 = vmatpush1.msra.mxu0 0.0
    %42 = vmatprep.subr.mxu0 0.0
    %43 = vmatpush1.msra.mxu0 0.0
    %44 = vmatprep.subr.mxu0 0.0
    %45 = vmatpush1.msra.mxu0 0.0
    %46 = vmatprep.subr.mxu0 0.0
    %47 = vmatpush1.msra.mxu0 0.0
    %48 = vmatprep.subr.mxu0 0.0
    %49 = vmatpush1.msra.mxu0 0.0
    %50 = vmatprep.subr.mxu0 0.0
    %51 = vmatpush1.msra.mxu0 0.0
    %52 = vmatprep.subr.mxu0 0.0
    %53 = vmatpush1.msra.mxu0 0.0
    %54 = vmatprep.subr.mxu0 0.0
    %55 = vmatpush1.msra.mxu0 0.0
    %56 = vmatprep.subr.mxu0 0.0
    %57 = vmatpush1.msra.mxu0 0.0
    %58 = vmatprep.subr.mxu0 0.0
    %59 = vmatpush1.msra.mxu0 0.0
    %60 = vmatprep.subr.mxu0 0.0
    %61 = vmatpush1.msra.mxu0 0.0
    %62 = vmatprep.subr.mxu0 0.0
    %63 = vmatpush1.msra.mxu0 0.0
    %64 = vmatprep.subr.mxu0 0.0
    %65 = vmatpush1.msra.mxu0 %v22
    %66 = vmatprep.subr.mxu0 0.0
    %67 = vmatpush2.msra.mxu0 0.0
    %68 = vmatprep.subr.mxu0 0.0
    %69 = vmatpush2.msra.mxu0 0.0
    %70 = vmatprep.subr.mxu0 0.0
    %71 = vmatpush2.msra.mxu0 0.0
    %72 = vmatprep.subr.mxu0 0.0
    %73 = vmatpush2.msra.mxu0 0.0
    %74 = vmatprep.subr.mxu0 0.0
    %75 = vmatpush2.msra.mxu0 0.0
    %76 = vmatprep.subr.mxu0 0.0
    %77 = vmatpush2.msra.mxu0 0.0
    %78 = vmatprep.subr.mxu0 0.0
    %79 = vmatpush2.msra.mxu0 0.0
    %80 = vmatprep.subr.mxu0 0.0
    %81 = vmatpush2.msra.mxu0 0.0
    %82 = vmatprep.subr.mxu0 0.0
    %83 = vmatpush2.msra.mxu0 0.0
    %84 = vmatprep.subr.mxu0 0.0
    %85 = vmatpush2.msra.mxu0 0.0
    %86 = vmatprep.subr.mxu0 0.0
    %87 = vmatpush2.msra.mxu0 0.0
    %88 = vmatprep.subr.mxu0 0.0
    %89 = vmatpush2.msra.mxu0 0.0
    %90 = vmatprep.subr.mxu0 0.0
    %91 = vmatpush2.msra.mxu0 0.0
    %92 = vmatprep.subr.mxu0 0.0
    %93 = vmatpush2.msra.mxu0 0.0
    %94 = vmatprep.subr.mxu0 0.0
    %95 = vmatpush2.msra.mxu0 0.0
    %96 = vmatprep.subr.mxu0 0.0
    %97 = vmatpush2.msra.mxu0 0.0
    %98 = vmatprep.mubr.f32.mxu0 0.0
    %99 = vmatmul.mubr.f32.gmra.mxu0 %v32
    %v100 = vpop.f32.mrf.mxu0
    %v101 = vadd.f32 %v28, %v100
    %v102 = vpop.f32.mrf.mxu0
    %103 = vdwg.mxu0
    %v104 = vmax.f32 %v101, 0.0
    %v105 = vld [vmem:[%s3] sm:$0xff]
    %v106 = vld [vmem:[%s3 + $0x8] sm:$0xff]
    %v107 = vld [vmem:[%s3 + $0x10] sm:$0xff]
    %v108 = vld [vmem:[%s4] sm:$0x1]
    %v110 = vlaneseq
    %v111 = vshrl.u32 %v110, 7
    %v112 = vsub.s32 0, %v111
    %v113 = vrot.slane %v108, %v112
    %vm115 = vcmask 195584
    %v117 = vsel %vm115, %v104, 0
    %119 = vmatprep.subr.mxu0 0.0
    %120 = vmatpush1.msra.mxu0 0.0
    %121 = vmatprep.subr.mxu0 0.0
    %122 = vmatpush1.msra.mxu0 0.0
    %123 = vmatprep.subr.mxu0 0.0
    %124 = vmatpush1.msra.mxu0 0.0
    %125 = vmatprep.subr.mxu0 0.0
    %126 = vmatpush1.msra.mxu0 0.0
    %127 = vmatprep.subr.mxu0 0.0
    %128 = vmatpush1.msra.mxu0 0.0
    %129 = vmatprep.subr.mxu0 0.0
    %130 = vmatpush1.msra.mxu0 0.0
    %131 = vmatprep.subr.mxu0 0.0
    %132 = vmatpush1.msra.mxu0 0.0
    %133 = vmatprep.subr.mxu0 0.0
    %134 = vmatpush1.msra.mxu0 0.0
    %135 = vmatprep.subr.mxu0 0.0
    %136 = vmatpush1.msra.mxu0 0.0
    %137 = vmatprep.subr.mxu0 0.0
    %138 = vmatpush1.msra.mxu0 0.0
    %139 = vmatprep.subr.mxu0 0.0
    %140 = vmatpush1.msra.mxu0 0.0
    %141 = vmatprep.subr.mxu0 0.0
    %142 = vmatpush1.msra.mxu0 0.0
    %143 = vmatprep.subr.mxu0 0.0
    %144 = vmatpush1.msra.mxu0 0.0
    %145 = vmatprep.subr.mxu0 0.0
    %146 = vmatpush1.msra.mxu0 %v107
    %147 = vmatprep.subr.mxu0 0.0
    %148 = vmatpush1.msra.mxu0 %v106
    %149 = vmatprep.subr.mxu0 0.0
    %150 = vmatpush1.msra.mxu0 %v105
    %151 = vmatprep.subr.mxu0 0.0
    %152 = vmatpush2.msra.mxu0 0.0
    %153 = vmatprep.subr.mxu0 0.0
    %154 = vmatpush2.msra.mxu0 0.0
    %155 = vmatprep.subr.mxu0 0.0
    %156 = vmatpush2.msra.mxu0 0.0
    %157 = vmatprep.subr.mxu0 0.0
    %158 = vmatpush2.msra.mxu0 0.0
    %159 = vmatprep.subr.mxu0 0.0
    %160 = vmatpush2.msra.mxu0 0.0
    %161 = vmatprep.subr.mxu0 0.0
    %162 = vmatpush2.msra.mxu0 0.0
    %163 = vmatprep.subr.mxu0 0.0
    %164 = vmatpush2.msra.mxu0 0.0
    %165 = vmatprep.subr.mxu0 0.0
    %166 = vmatpush2.msra.mxu0 0.0
    %167 = vmatprep.subr.mxu0 0.0
    %168 = vmatpush2.msra.mxu0 0.0
    %169 = vmatprep.subr.mxu0 0.0
    %170 = vmatpush2.msra.mxu0 0.0
    %171 = vmatprep.subr.mxu0 0.0
    %172 = vmatpush2.msra.mxu0 0.0
    %173 = vmatprep.subr.mxu0 0.0
    %174 = vmatpush2.msra.mxu0 0.0
    %175 = vmatprep.subr.mxu0 0.0
    %176 = vmatpush2.msra.mxu0 0.0
    %177 = vmatprep.subr.mxu0 0.0
    %178 = vmatpush2.msra.mxu0 0.0
    %179 = vmatprep.subr.mxu0 0.0
    %180 = vmatpush2.msra.mxu0 0.0
    %181 = vmatprep.subr.mxu0 0.0
    %182 = vmatpush2.msra.mxu0 0.0
    %183 = vmatprep.mubr.f32.mxu0 0.0
    %184 = vmatmul.mubr.f32.gmra.mxu0 %v117
    %v185 = vpop.f32.mrf.mxu0
    %v186 = vadd.f32 %v113, %v185
    %v187 = vpop.f32.mrf.mxu0
    %188 = vdwg.mxu0
    %190 = vrot.lane.b32.xlu0 %v186, 126
    %v191 = vpop.permute.xlu0 %190
    %vm193 = vcmask 9216
    %v194 = vsel %vm193, %v191, 0.0
    %195 = vadd.xlane.f32.xlu0 %v194
    %v196 = vpop.xlane.xlu0 %195
    %v197 = vlaneseq
    %v198 = vshrl.u32 %v197, 7
    %v199 = vlaneseq
    %v200 = vand.u32 %v199, 127
    %vm201 = vcmp.eq.s32.totalorder %v198, %v200
    %v202 = vsel %vm201, 1, 0
    %v203 = vcvt.s32.f32 %v202
    %v204 = vmul.f32 %v196, %v203
    %v205 = vsel %vm193, %v204, 0.0
    %v206 = vrot.slane %v205, 4
    %v207 = vadd.f32 %v205, %v206
    %v208 = vrot.slane %v207, 2
    %v209 = vadd.f32 %v207, %v208
    %v210 = vrot.slane %v209, 1
    %v211 = vadd.f32 %v209, %v210
    %v212 = vmul.f32 %v211, 0.5
    %214 = vrot.lane.b32.xlu0 %v212, 2
    %v215 = vpop.permute.xlu0 %214
    %v217 = vsub.f32 %v186, %v215
    %219 = vrot.lane.b32.xlu0 %v217, 126
    %v220 = vpop.permute.xlu0 %219
    %v222 = vadd.f32 %v186, %v220
    %223 = vst.msk [vmem:[#allocation2] sm:$0x3] %vm193, %v222
    // Predicated region
    $region22: #{tpu_custom_call.1} parent=1 // pred_check
      _
    $region23: #{tpu_custom_call.1} parent=1 // pred_check_branch
      %225 = sbr.rel (0) target = $region25
    $region24: #{tpu_custom_call.1} parent=1 // pred_region
      %s227 = ssub.s32 32, 32
      %228 = vsyncadd [#allocation3], %s227
      %s230 = sshll.u32 [#allocation2], 4
      %s231 = int_to_ptr.vmem [resolvable:$true] %s230
      %233 = dma.vmem_to_hbm [thread:$0]  %s231, 32, %s5, [#allocation3]
    $region25: #{tpu_custom_call.1} parent=1 // pred_fallthru
      _
    // Predicated region
    $region26: #{tpu_custom_call.1} parent=1 // pred_check
      _
    $region27: #{tpu_custom_call.1} parent=1 // pred_check_branch
      %235 = sbr.rel (0) target = $region29
    $region28: #{tpu_custom_call.1} parent=1 // pred_region
      %236 = dma.done [#allocation3], 32
    $region29: #{tpu_custom_call.1} parent=1 // pred_fallthru
      _
    %237 = vsyncpa [#allocation3], 1

</llo_original>
